<compile_context>
chip_gen: v5e
topology: v5e:2x2
jax: 0.10.0
libtpu: 0.0.40
codegen_flags: <defaults>
</compile_context>

<pallas_src>
import functools

import jax
import jax.numpy as jnp
from jax.experimental import pallas as pl
from jax.experimental.pallas import tpu as pltpu


# ---------------------------------------------------------------------------
# VMEM budget (per-generation aware, conservative fallback)
# ---------------------------------------------------------------------------
def _vmem_budget_bytes():
    try:
        cap = int(pltpu.get_tpu_info().vmem_capacity_bytes)
    except Exception:
        cap = 64 * 1024 * 1024  # v7x physical VMEM (most conservative generation)
    # leave headroom; never ask for more than ~100 MiB scoped (v5e/v6e guidance)
    return min((cap * 3) // 4, 100 * 1024 * 1024)


# ---------------------------------------------------------------------------
# Kernel 1: whole GCN stack fused (projection -> L residual GCN layers ->
#           output layer -> embeddings sum), everything VMEM-resident.
# ---------------------------------------------------------------------------
def _fused_gcn_stack_kernel(xin_ref, embs_ref, adj_ref, pw_ref, pb_ref,
                            lw_ref, lb_ref, ow_ref, ob_ref, out_ref, emb_ref):
    f32 = jnp.float32
    adj = adj_ref[...]
    x = jnp.dot(xin_ref[...], pw_ref[...], preferred_element_type=f32) + pb_ref[...]
    emb_acc = embs_ref[...].astype(f32)
    num_layers = lw_ref.shape[0]
    for l in range(num_layers):  # static unroll (num_layers known at trace time)
        h = jnp.dot(x, lw_ref[l], preferred_element_type=f32) + lb_ref[l]
        h = jnp.maximum(h, 0.0)  # ReLU activation
        x = x + jnp.dot(adj, h, preferred_element_type=f32)
        if l < num_layers - 1:   # last layer's x is replaced by `out` in the sum
            emb_acc = emb_acc + x
    out = jnp.dot(x, ow_ref[...], preferred_element_type=f32) + ob_ref[...]
    emb_acc = emb_acc + out
    out_ref[...] = out.astype(out_ref.dtype)
    emb_ref[...] = emb_acc.astype(emb_ref.dtype)


def pallas_fused_gcn_stack(xin, emb_s, adj, proj_w, proj_b,
                           layer_ws, layer_bs, out_w, out_b, *, budget):
    n, din = xin.shape
    d = proj_w.shape[1]
    L = len(layer_ws)
    lw = jnp.stack(list(layer_ws), axis=0)                              # (L, d, d)
    lb = jnp.stack([b.reshape(1, d) for b in layer_bs], axis=0)         # (L, 1, d)
    pb = proj_b.reshape(1, d)
    ob = out_b.reshape(1, d)
    out, emb = pl.pallas_call(
        _fused_gcn_stack_kernel,
        out_shape=(jax.ShapeDtypeStruct((n, d), xin.dtype),
                   jax.ShapeDtypeStruct((n, d), xin.dtype)),
        grid=(1,),
        in_specs=[
            pl.BlockSpec((n, din), lambda i: (0, 0)),
            pl.BlockSpec((n, d), lambda i: (0, 0)),
            pl.BlockSpec((n, n), lambda i: (0, 0)),
            pl.BlockSpec((din, d), lambda i: (0, 0)),
            pl.BlockSpec((1, d), lambda i: (0, 0)),
            pl.BlockSpec((L, d, d), lambda i: (0, 0, 0)),
            pl.BlockSpec((L, 1, d), lambda i: (0, 0, 0)),
            pl.BlockSpec((d, d), lambda i: (0, 0)),
            pl.BlockSpec((1, d), lambda i: (0, 0)),
        ],
        out_specs=(pl.BlockSpec((n, d), lambda i: (0, 0)),
                   pl.BlockSpec((n, d), lambda i: (0, 0))),
        compiler_params=pltpu.CompilerParams(
            dimension_semantics=("arbitrary",),
            vmem_limit_bytes=budget,
        ),
    )(xin, emb_s, adj, proj_w, pb, lw, lb, out_w, ob)
    return out, emb


# ---------------------------------------------------------------------------
# Fallback kernel A: plain linear  y = x @ W + b
# ---------------------------------------------------------------------------
def _linear_kernel(x_ref, w_ref, b_ref, o_ref):
    h = jnp.dot(x_ref[...], w_ref[...], preferred_element_type=jnp.float32)
    h = h + b_ref[...]
    o_ref[...] = h.astype(o_ref.dtype)


def pallas_linear(x, w, b):
    n, din = x.shape
    dout = w.shape[1]
    b2 = b.reshape(1, dout)
    return pl.pallas_call(
        _linear_kernel,
        out_shape=jax.ShapeDtypeStruct((n, dout), x.dtype),
        grid=(1,),
        in_specs=[
            pl.BlockSpec((n, din), lambda i: (0, 0)),
            pl.BlockSpec((din, dout), lambda i: (0, 0)),
            pl.BlockSpec((1, dout), lambda i: (0, 0)),
        ],
        out_specs=pl.BlockSpec((n, dout), lambda i: (0, 0)),
    )(x, w, b2)


# ---------------------------------------------------------------------------
# Fallback kernel B: fused GCN residual layer  x_out = x + adj @ relu(x @ W + b)
# ---------------------------------------------------------------------------
def _gcn_layer_kernel(x_ref, w_ref, b_ref, adj_ref, o_ref):
    h = jnp.dot(x_ref[...], w_ref[...], preferred_element_type=jnp.float32)
    h = jnp.maximum(h + b_ref[...], 0.0)  # ReLU activation
    agg = jnp.dot(adj_ref[...], h, preferred_element_type=jnp.float32)
    o_ref[...] = (x_ref[...].astype(jnp.float32) + agg).astype(o_ref.dtype)


def pallas_gcn_layer(x, w, b, adj):
    n, d = x.shape
    b2 = b.reshape(1, d)
    return pl.pallas_call(
        _gcn_layer_kernel,
        out_shape=jax.ShapeDtypeStruct((n, d), x.dtype),
        grid=(1,),
        in_specs=[
            pl.BlockSpec((n, d), lambda i: (0, 0)),
            pl.BlockSpec((d, d), lambda i: (0, 0)),
            pl.BlockSpec((1, d), lambda i: (0, 0)),
            pl.BlockSpec((n, n), lambda i: (0, 0)),
        ],
        out_specs=pl.BlockSpec((n, d), lambda i: (0, 0)),
    )(x, w, b2, adj)


# ---------------------------------------------------------------------------
# Fallback kernel C: sum / mean over the leading axis of a (S, R, C) tensor
# ---------------------------------------------------------------------------
def _reduce_axis0_collapsed_kernel(x_ref, o_ref, *, scale):
    # Whole tensor resident in VMEM: one step, no accumulator, no init/finalize.
    acc = jnp.sum(x_ref[...].astype(jnp.float32), axis=0)
    if scale != 1.0:
        acc = acc * jnp.float32(scale)  # compile-time reciprocal (no runtime divide)
    o_ref[...] = acc.astype(o_ref.dtype)


def _reduce_axis0_tiled_kernel(x_ref, o_ref, *, scale):
    s = pl.program_id(1)  # reduction axis is last in the grid ("arbitrary")

    @pl.when(s == 0)
    def _():
        o_ref[...] = jnp.zeros_like(o_ref)

    # Fold TS leading rows per grid step; accumulate directly into the resident
    # f32 output (no VMEM scratch buffer).
    o_ref[...] += jnp.sum(x_ref[...].astype(jnp.float32), axis=0)

    if scale != 1.0:
        @pl.when(s == pl.num_programs(1) - 1)
        def _():
            o_ref[...] = o_ref[...] * jnp.float32(scale)


def reduce_axis0(x, mean=False, vmem_budget_bytes=None):
    """Sum (or mean) over axis 0 of a (S, R, C) array -> (R, C)."""
    S, R, C = x.shape
    scale = (1.0 / S) if mean else 1.0
    budget = vmem_budget_bytes if vmem_budget_bytes is not None else _vmem_budget_bytes()
    itemsize = x.dtype.itemsize
    total_in = S * R * C * itemsize
    out_f32 = R * C * 4

    if total_in + out_f32 <= budget // 2:
        # Small-shape regime: collapse the grid entirely.
        return pl.pallas_call(
            functools.partial(_reduce_axis0_collapsed_kernel, scale=scale),
            out_shape=jax.ShapeDtypeStruct((R, C), x.dtype),
            grid=(1,),
            in_specs=[pl.BlockSpec((S, R, C), lambda i: (0, 0, 0))],
            out_specs=pl.BlockSpec((R, C), lambda i: (0, 0)),
            compiler_params=pltpu.CompilerParams(
                dimension_semantics=("arbitrary",),
                vmem_limit_bytes=budget,
            ),
        )(x)

    # Streaming regime: tile rows (parallel, lets v7x's 2 TCs both stream) and fold
    # as many S-steps per grid iteration as the VMEM budget allows (big DMAs).
    tr = R // 2 if (R % 16 == 0) else R  # row tile: multiple of 8 or the full dim
    per_step_bytes = tr * C * itemsize
    out_tile_bytes = tr * C * 4
    ts = 1
    for d in range(1, S + 1):
        if S % d:
            continue
        # default double-buffered input + resident f32 output tile
        if 2 * d * per_step_bytes + 2 * out_tile_bytes <= budget:
            ts = d

    out = pl.pallas_call(
        functools.partial(_reduce_axis0_tiled_kernel, scale=scale),
        out_shape=jax.ShapeDtypeStruct((R, C), jnp.float32),
        grid=(R // tr, S // ts),
        in_specs=[pl.BlockSpec((ts, tr, C), lambda r, s: (s, r, 0))],
        out_specs=pl.BlockSpec((tr, C), lambda r, s: (r, 0)),
        compiler_params=pltpu.CompilerParams(
            dimension_semantics=("parallel", "arbitrary"),
            vmem_limit_bytes=budget,
        ),
    )(x)
    if out.dtype != x.dtype:
        out = out.astype(x.dtype)
    return out


# ---------------------------------------------------------------------------
# Epilogue (plain JAX): gathers, cosine similarity, InfoNCE, L2 reg
# ---------------------------------------------------------------------------
def _cosine_sim(a, b, eps=1e-8):
    num = jnp.sum(a * b, axis=-1)
    denom = jnp.maximum(
        jnp.linalg.norm(a, axis=-1) * jnp.linalg.norm(b, axis=-1), eps
    )
    return num / denom


def _contrastive_loss(out, sids, pos, negs, temp):
    negs_t = negs.T
    batch_size, k = negs_t.shape
    emb_pos = out[sids]
    emb_pos_pair = out[pos]
    emb_neg = out[negs_t.reshape(-1)].reshape(batch_size, k, -1)

    pos_sim = _cosine_sim(emb_pos, emb_pos_pair)[:, None]      # (B, 1)
    neg_sim = _cosine_sim(emb_pos[:, None, :], emb_neg)        # (B, K)
    e_pos = jnp.exp(pos_sim / temp)
    e_neg = jnp.exp(neg_sim / temp)
    loss_cl = -jnp.log(e_pos / (e_pos + e_neg + 1e-8))
    return jnp.mean(loss_cl)


def _reg_loss(params, lambda_1):
    reg_params = (
        [params["emb_p"], params["proj_w"], params["proj_b"],
         params["out_w"], params["out_b"]]
        + list(params["layer_ws"]) + list(params["layer_bs"])
    )
    return sum(jnp.sum(jnp.square(p)) for p in reg_params) * lambda_1


# ---------------------------------------------------------------------------
# Top_HiCL_H forward (GCN branch), Pallas-kernel backed
# ---------------------------------------------------------------------------
def top_hicl_forward(params, adj_norm, sids, position_ids, pos, negs, *,
                     temp, lambda_1, force_unfused=False):
    emb_s = params["emb_s"]
    emb_p = jnp.take(params["emb_p"], position_ids, axis=0)
    xin = jnp.concatenate([emb_s, emb_p], axis=1)

    n, d = emb_s.shape
    din = xin.shape[1]
    L = len(params["layer_ws"])
    budget = _vmem_budget_bytes()
    fused_bytes = 4 * (
        n * din + n * d + n * n + din * d + L * d * d + d * d + (L + 2) * d  # inputs
        + 2 * n * d                                                          # outputs
        + 4 * n * d                                                          # f32 live values
    )

    if (not force_unfused) and fused_bytes <= budget // 2:
        # Whole forward in a single fused Pallas kernel.
        out, embeddings = pallas_fused_gcn_stack(
            xin, emb_s, adj_norm,
            params["proj_w"], params["proj_b"],
            params["layer_ws"], params["layer_bs"],
            params["out_w"], params["out_b"],
            budget=budget)
    else:
        # Per-layer fallback for graphs too large for one VMEM-resident kernel.
        x = pallas_linear(xin, params["proj_w"], params["proj_b"])
        embeddings_list = [emb_s]
        for idx, (w, b) in enumerate(zip(params["layer_ws"], params["layer_bs"])):
            x = pallas_gcn_layer(x, w, b, adj_norm)
            if idx < L - 1:  # last layer's x is overwritten by `out` in the module
                embeddings_list.append(x)
        out = pallas_linear(x, params["out_w"], params["out_b"])
        embeddings_list.append(out)
        embeddings = reduce_axis0(jnp.stack(embeddings_list, axis=0), mean=False)

    loss_cl = _contrastive_loss(out, sids, pos, negs, temp)
    loss_reg = _reg_loss(params, lambda_1)
    loss = loss_cl + loss_reg
    return loss, loss_cl, loss_reg, embeddings


# ---------------------------------------------------------------------------
# Pure-JAX reference (no Pallas) for correctness checking
# ---------------------------------------------------------------------------
def reference_forward(params, adj_norm, sids, position_ids, pos, negs, *, temp, lambda_1):
    hp = jax.lax.Precision.HIGHEST
    emb_s = params["emb_s"]
    emb_p = jnp.take(params["emb_p"], position_ids, axis=0)
    x = jnp.concatenate([emb_s, emb_p], axis=1)
    x = jnp.dot(x, params["proj_w"], precision=hp) + params["proj_b"]

    L = len(params["layer_ws"])
    embeddings_list = [emb_s]
    for idx, (w, b) in enumerate(zip(params["layer_ws"], params["layer_bs"])):
        h = jnp.maximum(jnp.dot(x, w, precision=hp) + b, 0.0)
        x = x + jnp.dot(adj_norm, h, precision=hp)
        if idx < L - 1:
            embeddings_list.append(x)

    out = jnp.dot(x, params["out_w"], precision=hp) + params["out_b"]
    embeddings_list.append(out)
    embeddings = jnp.sum(jnp.stack(embeddings_list, axis=0), axis=0)

    loss_cl = _contrastive_loss(out, sids, pos, negs, temp)
    loss_reg = _reg_loss(params, lambda_1)
    return loss_cl + loss_reg, loss_cl, loss_reg, embeddings


# ---------------------------------------------------------------------------
# Demo / self-test
# ---------------------------------------------------------------------------
if __name__ == "__main__":
    key = jax.random.PRNGKey(0)
    N, dim, pos_dim, depth, num_layers = 64, 128, 32, 8, 2
    B, K = 8, 4
    temp, lambda_1 = 0.5, 1e-4

    keys = jax.random.split(key, 16)

    def xavier(k, shape):
        fan_in, fan_out = shape
        s = (6.0 / (fan_in + fan_out)) ** 0.5
        return jax.random.uniform(k, shape, jnp.float32, -s, s)

    params = {
        "emb_s": 0.1 * jax.random.normal(keys[0], (N, dim), jnp.float32),
        "emb_p": 0.1 * jax.random.normal(keys[1], (depth, pos_dim), jnp.float32),
        "proj_w": xavier(keys[2], (dim + pos_dim, dim)),
        "proj_b": jnp.zeros((dim,), jnp.float32),
        "layer_ws": [xavier(keys[3 + l], (dim, dim)) for l in range(num_layers)],
        "layer_bs": [jnp.zeros((dim,), jnp.float32) for _ in range(num_layers)],
        "out_w": xavier(keys[6], (dim, dim)),
        "out_b": jnp.zeros((dim,), jnp.float32),
    }

    # dense stand-in for the (sparse) row-normalized adjacency
    a = (jax.random.uniform(keys[7], (N, N)) < 0.1).astype(jnp.float32)
    a = jnp.minimum(a + a.T + jnp.eye(N, dtype=jnp.float32), 1.0)
    adj_norm = a / jnp.sum(a, axis=1, keepdims=True)

    position_ids = jax.random.randint(keys[8], (N,), 0, depth)
    sids = jax.random.randint(keys[9], (B,), 0, N)
    pos_ids = jax.random.randint(keys[10], (B,), 0, N)
    negs = jax.random.randint(keys[11], (K, B), 0, N)  # transposed inside, as in torch

    ref_loss, ref_cl, ref_reg, ref_emb = reference_forward(
        params, adj_norm, sids, position_ids, pos_ids, negs,
        temp=temp, lambda_1=lambda_1)

    # Path 1: fully fused single-kernel forward.
    loss, loss_cl, loss_reg, embeddings = top_hicl_forward(
        params, adj_norm, sids, position_ids, pos_ids, negs,
        temp=temp, lambda_1=lambda_1)
    jax.block_until_ready(loss)
    assert jnp.allclose(loss, ref_loss, atol=2e-3, rtol=2e-3), (loss, ref_loss)
    assert jnp.allclose(loss_cl, ref_cl, atol=2e-3, rtol=2e-3)
    assert jnp.allclose(loss_reg, ref_reg, atol=2e-3, rtol=2e-3)
    assert jnp.allclose(embeddings, ref_emb, atol=2e-3, rtol=2e-3)

    # Path 2: per-layer fallback kernels + Pallas axis-0 reducer.
    loss2, cl2, reg2, emb2 = top_hicl_forward(
        params, adj_norm, sids, position_ids, pos_ids, negs,
        temp=temp, lambda_1=lambda_1, force_unfused=True)
    jax.block_until_ready(loss2)
    assert jnp.allclose(loss2, ref_loss, atol=2e-3, rtol=2e-3), (loss2, ref_loss)
    assert jnp.allclose(emb2, ref_emb, atol=2e-3, rtol=2e-3)

    # Also exercise the streaming (tiled, multi-row-per-step) path of the reducer
    # by forcing a tiny VMEM budget, plus the mean (compile-time reciprocal) path.
    y = jax.random.normal(keys[12], (32, 64, 256), jnp.float32)
    tiled = reduce_axis0(y, mean=False, vmem_budget_bytes=1 << 20)
    jax.block_until_ready(tiled)
    assert jnp.allclose(tiled, jnp.sum(y, axis=0), atol=1e-4, rtol=1e-4)

    m = reduce_axis0(y[:4], mean=True)
    jax.block_until_ready(m)
    assert jnp.allclose(m, jnp.mean(y[:4], axis=0), atol=1e-5, rtol=1e-5)

    print("KERNEL_OK")
</pallas_src>

<mosaic_0001>
module attributes {stable_mosaic.version = 11 : i64} {
  func.func @_fused_gcn_stack_kernel(%arg0: i32, %arg1: memref<64x160xf32, #tpu.memory_space<vmem>>, %arg2: memref<64x128xf32, #tpu.memory_space<vmem>>, %arg3: memref<64x64xf32, #tpu.memory_space<vmem>>, %arg4: memref<160x128xf32, #tpu.memory_space<vmem>>, %arg5: memref<1x128xf32, #tpu.memory_space<vmem>>, %arg6: memref<2x128x128xf32, #tpu.memory_space<vmem>>, %arg7: memref<2x1x128xf32, #tpu.memory_space<vmem>>, %arg8: memref<128x128xf32, #tpu.memory_space<vmem>>, %arg9: memref<1x128xf32, #tpu.memory_space<vmem>>, %arg10: memref<64x128xf32, #tpu.memory_space<vmem>>, %arg11: memref<64x128xf32, #tpu.memory_space<vmem>>) attributes {dimension_semantics = [#tpu.dimension_semantics<arbitrary>], iteration_bounds = array<i64: 1>, scalar_prefetch = 0 : i64, scratch_operands = 0 : i64, tpu.core_type = #tpu.core_type<tc>, window_params = [{pipeline_mode = #tpu.pipeline_mode<synchronous>, transform_indices = @transform_0, window_bounds = array<i64: 64, 160>}, {pipeline_mode = #tpu.pipeline_mode<synchronous>, transform_indices = @transform_1, window_bounds = array<i64: 64, 128>}, {pipeline_mode = #tpu.pipeline_mode<synchronous>, transform_indices = @transform_2, window_bounds = array<i64: 64, 64>}, {pipeline_mode = #tpu.pipeline_mode<synchronous>, transform_indices = @transform_3, window_bounds = array<i64: 160, 128>}, {pipeline_mode = #tpu.pipeline_mode<synchronous>, transform_indices = @transform_4, window_bounds = array<i64: 1, 128>}, {pipeline_mode = #tpu.pipeline_mode<synchronous>, transform_indices = @transform_5, window_bounds = array<i64: 2, 128, 128>}, {pipeline_mode = #tpu.pipeline_mode<synchronous>, transform_indices = @transform_6, window_bounds = array<i64: 2, 1, 128>}, {pipeline_mode = #tpu.pipeline_mode<synchronous>, transform_indices = @transform_7, window_bounds = array<i64: 128, 128>}, {pipeline_mode = #tpu.pipeline_mode<synchronous>, transform_indices = @transform_8, window_bounds = array<i64: 1, 128>}, {pipeline_mode = #tpu.pipeline_mode<synchronous>, transform_indices = @transform_9, window_bounds = array<i64: 64, 128>}, {pipeline_mode = #tpu.pipeline_mode<synchronous>, transform_indices = @transform_10, window_bounds = array<i64: 64, 128>}]} {
    %c0 = arith.constant 0 : index
    %c0_0 = arith.constant 0 : index
    %0 = vector.load %arg3[%c0, %c0_0] : memref<64x64xf32, #tpu.memory_space<vmem>>, vector<64x64xf32>
    %c0_1 = arith.constant 0 : index
    %c0_2 = arith.constant 0 : index
    %1 = vector.load %arg1[%c0_1, %c0_2] : memref<64x160xf32, #tpu.memory_space<vmem>>, vector<64x160xf32>
    %c0_3 = arith.constant 0 : index
    %c0_4 = arith.constant 0 : index
    %2 = vector.load %arg4[%c0_3, %c0_4] : memref<160x128xf32, #tpu.memory_space<vmem>>, vector<160x128xf32>
    %cst = arith.constant dense<0.000000e+00> : vector<64x128xf32>
    %3 = tpu.matmul %1, %2, %cst {dimension_numbers = #tpu.dot_dimension_numbers<[1], [0], [0], [1], [0, 0, 1, 1], [], []>} : vector<64x160xf32>, vector<160x128xf32>, vector<64x128xf32> -> vector<64x128xf32>
    %c0_5 = arith.constant 0 : index
    %c0_6 = arith.constant 0 : index
    %4 = vector.load %arg5[%c0_5, %c0_6] : memref<1x128xf32, #tpu.memory_space<vmem>>, vector<1x128xf32>
    %5 = vector.broadcast %4 : vector<1x128xf32> to vector<64x128xf32>
    %6 = arith.addf %3, %5 : vector<64x128xf32>
    %c0_7 = arith.constant 0 : index
    %c0_8 = arith.constant 0 : index
    %7 = vector.load %arg2[%c0_7, %c0_8] : memref<64x128xf32, #tpu.memory_space<vmem>>, vector<64x128xf32>
    %c0_9 = arith.constant 0 : index
    %c0_10 = arith.constant 0 : index
    %c0_11 = arith.constant 0 : index
    %8 = vector.load %arg6[%c0_9, %c0_10, %c0_11] : memref<2x128x128xf32, #tpu.memory_space<vmem>>, vector<1x128x128xf32>
    %9 = vector.shape_cast %8 : vector<1x128x128xf32> to vector<128x128xf32>
    %cst_12 = arith.constant dense<0.000000e+00> : vector<64x128xf32>
    %10 = tpu.matmul %6, %9, %cst_12 {dimension_numbers = #tpu.dot_dimension_numbers<[1], [0], [0], [1], [0, 0, 1, 1], [], []>} : vector<64x128xf32>, vector<128x128xf32>, vector<64x128xf32> -> vector<64x128xf32>
    %c0_13 = arith.constant 0 : index
    %c0_14 = arith.constant 0 : index
    %c0_15 = arith.constant 0 : index
    %11 = vector.load %arg7[%c0_13, %c0_14, %c0_15] : memref<2x1x128xf32, #tpu.memory_space<vmem>>, vector<1x1x128xf32>
    %12 = vector.shape_cast %11 : vector<1x1x128xf32> to vector<1x128xf32>
    %13 = vector.broadcast %12 : vector<1x128xf32> to vector<64x128xf32>
    %14 = arith.addf %10, %13 : vector<64x128xf32>
    %cst_16 = arith.constant 0.000000e+00 : f32
    %15 = vector.broadcast %cst_16 : f32 to vector<64x128xf32>
    %16 = arith.maximumf %14, %15 : vector<64x128xf32>
    %cst_17 = arith.constant dense<0.000000e+00> : vector<64x128xf32>
    %17 = tpu.matmul %0, %16, %cst_17 {dimension_numbers = #tpu.dot_dimension_numbers<[1], [0], [0], [1], [0, 0, 1, 1], [], []>} : vector<64x64xf32>, vector<64x128xf32>, vector<64x128xf32> -> vector<64x128xf32>
    %18 = arith.addf %6, %17 : vector<64x128xf32>
    %19 = arith.addf %7, %18 : vector<64x128xf32>
    %c1 = arith.constant 1 : index
    %c0_18 = arith.constant 0 : index
    %c0_19 = arith.constant 0 : index
    %20 = vector.load %arg6[%c1, %c0_18, %c0_19] : memref<2x128x128xf32, #tpu.memory_space<vmem>>, vector<1x128x128xf32>
    %21 = vector.shape_cast %20 : vector<1x128x128xf32> to vector<128x128xf32>
    %cst_20 = arith.constant dense<0.000000e+00> : vector<64x128xf32>
    %22 = tpu.matmul %18, %21, %cst_20 {dimension_numbers = #tpu.dot_dimension_numbers<[1], [0], [0], [1], [0, 0, 1, 1], [], []>} : vector<64x128xf32>, vector<128x128xf32>, vector<64x128xf32> -> vector<64x128xf32>
    %c1_21 = arith.constant 1 : index
    %c0_22 = arith.constant 0 : index
    %c0_23 = arith.constant 0 : index
    %23 = vector.load %arg7[%c1_21, %c0_22, %c0_23] : memref<2x1x128xf32, #tpu.memory_space<vmem>>, vector<1x1x128xf32>
    %24 = vector.shape_cast %23 : vector<1x1x128xf32> to vector<1x128xf32>
    %25 = vector.broadcast %24 : vector<1x128xf32> to vector<64x128xf32>
    %26 = arith.addf %22, %25 : vector<64x128xf32>
    %cst_24 = arith.constant 0.000000e+00 : f32
    %27 = vector.broadcast %cst_24 : f32 to vector<64x128xf32>
    %28 = arith.maximumf %26, %27 : vector<64x128xf32>
    %cst_25 = arith.constant dense<0.000000e+00> : vector<64x128xf32>
    %29 = tpu.matmul %0, %28, %cst_25 {dimension_numbers = #tpu.dot_dimension_numbers<[1], [0], [0], [1], [0, 0, 1, 1], [], []>} : vector<64x64xf32>, vector<64x128xf32>, vector<64x128xf32> -> vector<64x128xf32>
    %30 = arith.addf %18, %29 : vector<64x128xf32>
    %c0_26 = arith.constant 0 : index
    %c0_27 = arith.constant 0 : index
    %31 = vector.load %arg8[%c0_26, %c0_27] : memref<128x128xf32, #tpu.memory_space<vmem>>, vector<128x128xf32>
    %cst_28 = arith.constant dense<0.000000e+00> : vector<64x128xf32>
    %32 = tpu.matmul %30, %31, %cst_28 {dimension_numbers = #tpu.dot_dimension_numbers<[1], [0], [0], [1], [0, 0, 1, 1], [], []>} : vector<64x128xf32>, vector<128x128xf32>, vector<64x128xf32> -> vector<64x128xf32>
    %c0_29 = arith.constant 0 : index
    %c0_30 = arith.constant 0 : index
    %33 = vector.load %arg9[%c0_29, %c0_30] : memref<1x128xf32, #tpu.memory_space<vmem>>, vector<1x128xf32>
    %34 = vector.broadcast %33 : vector<1x128xf32> to vector<64x128xf32>
    %35 = arith.addf %32, %34 : vector<64x128xf32>
    %36 = arith.addf %19, %35 : vector<64x128xf32>
    %c0_31 = arith.constant 0 : index
    %c0_32 = arith.constant 0 : index
    %37 = vector.load %arg10[%c0_31, %c0_32] : memref<64x128xf32, #tpu.memory_space<vmem>>, vector<64x128xf32>
    tpu.vector_store %arg10[%c0_31, %c0_32], %35 {strides = array<i32>} : memref<64x128xf32, #tpu.memory_space<vmem>>, vector<64x128xf32>,
    %c0_33 = arith.constant 0 : index
    %c0_34 = arith.constant 0 : index
    %38 = vector.load %arg11[%c0_33, %c0_34] : memref<64x128xf32, #tpu.memory_space<vmem>>, vector<64x128xf32>
    tpu.vector_store %arg11[%c0_33, %c0_34], %36 {strides = array<i32>} : memref<64x128xf32, #tpu.memory_space<vmem>>, vector<64x128xf32>,
    return
  }
  func.func @transform_0(%arg0: i32) -> (i32, i32) {
    %c0_i32 = arith.constant 0 : i32
    %c0_i32_0 = arith.constant 0 : i32
    %c0_i32_1 = arith.constant 0 : i32
    return %c0_i32, %c0_i32_0 : i32, i32
  }
  func.func @transform_1(%arg0: i32) -> (i32, i32) {
    %c0_i32 = arith.constant 0 : i32
    %c0_i32_0 = arith.constant 0 : i32
    %c0_i32_1 = arith.constant 0 : i32
    return %c0_i32, %c0_i32_0 : i32, i32
  }
  func.func @transform_2(%arg0: i32) -> (i32, i32) {
    %c0_i32 = arith.constant 0 : i32
    %c0_i32_0 = arith.constant 0 : i32
    %c0_i32_1 = arith.constant 0 : i32
    return %c0_i32, %c0_i32_0 : i32, i32
  }
  func.func @transform_3(%arg0: i32) -> (i32, i32) {
    %c0_i32 = arith.constant 0 : i32
    %c0_i32_0 = arith.constant 0 : i32
    %c0_i32_1 = arith.constant 0 : i32
    return %c0_i32, %c0_i32_0 : i32, i32
  }
  func.func @transform_4(%arg0: i32) -> (i32, i32) {
    %c0_i32 = arith.constant 0 : i32
    %c0_i32_0 = arith.constant 0 : i32
    %c0_i32_1 = arith.constant 0 : i32
    return %c0_i32, %c0_i32_0 : i32, i32
  }
  func.func @transform_5(%arg0: i32) -> (i32, i32, i32) {
    %c0_i32 = arith.constant 0 : i32
    %c0_i32_0 = arith.constant 0 : i32
    %c0_i32_1 = arith.constant 0 : i32
    %c0_i32_2 = arith.constant 0 : i32
    return %c0_i32, %c0_i32_0, %c0_i32_1 : i32, i32, i32
  }
  func.func @transform_6(%arg0: i32) -> (i32, i32, i32) {
    %c0_i32 = arith.constant 0 : i32
    %c0_i32_0 = arith.constant 0 : i32
    %c0_i32_1 = arith.constant 0 : i32
    %c0_i32_2 = arith.constant 0 : i32
    return %c0_i32, %c0_i32_0, %c0_i32_1 : i32, i32, i32
  }
  func.func @transform_7(%arg0: i32) -> (i32, i32) {
    %c0_i32 = arith.constant 0 : i32
    %c0_i32_0 = arith.constant 0 : i32
    %c0_i32_1 = arith.constant 0 : i32
    return %c0_i32, %c0_i32_0 : i32, i32
  }
  func.func @transform_8(%arg0: i32) -> (i32, i32) {
    %c0_i32 = arith.constant 0 : i32
    %c0_i32_0 = arith.constant 0 : i32
    %c0_i32_1 = arith.constant 0 : i32
    return %c0_i32, %c0_i32_0 : i32, i32
  }
  func.func @transform_9(%arg0: i32) -> (i32, i32) {
    %c0_i32 = arith.constant 0 : i32
    %c0_i32_0 = arith.constant 0 : i32
    %c0_i32_1 = arith.constant 0 : i32
    return %c0_i32, %c0_i32_0 : i32, i32
  }
  func.func @transform_10(%arg0: i32) -> (i32, i32) {
    %c0_i32 = arith.constant 0 : i32
    %c0_i32_0 = arith.constant 0 : i32
    %c0_i32_1 = arith.constant 0 : i32
    return %c0_i32, %c0_i32_0 : i32, i32
  }
}

</mosaic_0001>

<llo_original>
// kernel: tpu_custom_call.1
$region0: #{tpu_custom_call.1}
  #allocation0 [shape = 'u32[]', space=smem, size = 0x4, offset = 0x4, fixed_abs, tag = 'smem constant byte address 0x4 - core index']
  #allocation1 [shape = 'u32[72,128]{1,0:T(1,128)}', space=vmem, size = 0x9000, scoped, tag = 'internal scratch']
  %s0 = inlined_call_operand.hbm [shape: f32[64,160], index: 0, kind: input, shape index: {}]
  %s1 = inlined_call_operand.hbm [shape: f32[64,128], index: 1, kind: input, shape index: {}]
  %s2 = inlined_call_operand.hbm [shape: f32[64,64], index: 2, kind: input, shape index: {}]
  %s3 = inlined_call_operand.hbm [shape: f32[160,128], index: 3, kind: input, shape index: {}]
  %s4 = inlined_call_operand.vmem [shape: f32[1,128], index: 4, kind: input, shape index: {}]
  %s5 = inlined_call_operand.hbm [shape: f32[2,128,128], index: 5, kind: input, shape index: {}]
  %s6 = inlined_call_operand.vmem [shape: f32[2,1,128], index: 6, kind: input, shape index: {}]
  %s7 = inlined_call_operand.hbm [shape: f32[128,128], index: 7, kind: input, shape index: {}]
  %s8 = inlined_call_operand.vmem [shape: f32[1,128], index: 8, kind: input, shape index: {}]
  %s9 = inlined_call_operand.hbm [shape: f32[64,128], index: 9, kind: output, shape index: {0}]
  %s10 = inlined_call_operand.hbm [shape: f32[64,128], index: 10, kind: output, shape index: {1}]
  %11 = xla_tuple %s9, %s10
  %s12 = sld [smem:[#allocation0]]
  $region78: #{tpu_custom_call.1} parent=0
    _
  %s14 = ssub.s32 1, %s12
  %s15 = scalar_select 0, %s14, %s12
  $region1: #{tpu_custom_call.1} parent=0
    #allocation2 [shape = 'u8[65536]{0}', space=vmem, size = 0x10000, scoped, tag = 'input window, operand 0, single buffered']
    #allocation3 [shape = 's32[1]{0}', space=sflag, size = 0x4, scoped, tag = 'scoped memory for tpu_custom_call.1']
    #allocation4 [shape = 's32[1]{0}', space=sflag, size = 0x4, scoped, tag = 'scoped memory for tpu_custom_call.1']
    #allocation5 [shape = 'u8[32768]{0}', space=vmem, size = 0x8000, scoped, tag = 'input window, operand 1, single buffered']
    #allocation6 [shape = 's32[1]{0}', space=sflag, size = 0x4, scoped, tag = 'scoped memory for tpu_custom_call.1']
    #allocation7 [shape = 'u8[32768]{0}', space=vmem, size = 0x8000, scoped, tag = 'input window, operand 2, single buffered']
    #allocation8 [shape = 'u8[81920]{0}', space=vmem, size = 0x14000, scoped, tag = 'input window, operand 3, single buffered']
    #allocation9 [shape = 's32[1]{0}', space=sflag, size = 0x4, scoped, tag = 'scoped memory for tpu_custom_call.1']
    #allocation10 [shape = 'u8[131072]{0}', space=vmem, size = 0x20000, scoped, tag = 'input window, operand 5, single buffered']
    #allocation11 [shape = 'u8[65536]{0}', space=vmem, size = 0x10000, scoped, tag = 'input window, operand 7, single buffered']
    #allocation12 [shape = 's32[1]{0}', space=sflag, size = 0x4, scoped, tag = 'scoped memory for tpu_custom_call.1']
    #allocation13 [shape = 'u8[32768]{0}', space=vmem, size = 0x8000, scoped, tag = 'output window, operand 0, single buffered']
    #allocation14 [shape = 'u8[32768]{0}', space=vmem, size = 0x8000, scoped, tag = 'output window, operand 1, single buffered']
    #allocation15 [shape = 's32[1]{0}', space=sflag, size = 0x4, scoped, tag = 'scoped memory for tpu_custom_call.1']
    %16 = vsyncpa [#allocation3], 0
    %17 = vsyncpa [#allocation6], 0
    %18 = vsyncpa [#allocation9], 0
    %19 = vsyncpa [#allocation12], 0
    %20 = vsyncpa [#allocation4], 0
    %21 = vsyncpa [#allocation15], 0
    // Predicated region
    $region2: #{tpu_custom_call.1} parent=1 // pred_check
      _
    $region3: #{tpu_custom_call.1} parent=1 // pred_check_branch
      %23 = sbr.rel (0) target = $region5
    $region4: #{tpu_custom_call.1} parent=1 // pred_region
      %25 = vsyncadd [#allocation3], 0
      %s26 = sshll.u32 %s0, 4
      %s27 = int_to_ptr.hbm [resolvable:$true] %s26
      %s28 = sshll.u32 [#allocation2], 4
      %s29 = int_to_ptr.vmem [resolvable:$true] %s28
      %34 = dma.hbm_to_vmem [thread:$0]  %s27, 2048, %s29, [#allocation3], 256, 256, 16
    $region5: #{tpu_custom_call.1} parent=1 // pred_fallthru
      _
    // Predicated region
    $region6: #{tpu_custom_call.1} parent=1 // pred_check
      _
    $region7: #{tpu_custom_call.1} parent=1 // pred_check_branch
      %36 = sbr.rel (0) target = $region9
    $region8: #{tpu_custom_call.1} parent=1 // pred_region
      %38 = vsyncadd [#allocation6], 0
      %s39 = sshll.u32 %s1, 4
      %s40 = int_to_ptr.hbm [resolvable:$true] %s39
      %s41 = sshll.u32 [#allocation5], 4
      %s42 = int_to_ptr.vmem [resolvable:$true] %s41
      %47 = dma.hbm_to_vmem [thread:$0]  %s40, 1024, %s42, [#allocation6], 128, 128, 8
    $region9: #{tpu_custom_call.1} parent=1 // pred_fallthru
      _
    // Predicated region
    $region10: #{tpu_custom_call.1} parent=1 // pred_check
      _
    $region11: #{tpu_custom_call.1} parent=1 // pred_check_branch
      %49 = sbr.rel (0) target = $region13
    $region12: #{tpu_custom_call.1} parent=1 // pred_region
      %51 = vsyncadd [#allocation6], 0
      %s52 = sshll.u32 %s2, 4
      %s53 = int_to_ptr.hbm [resolvable:$true] %s52
      %s54 = sshll.u32 [#allocation7], 4
      %s55 = int_to_ptr.vmem [resolvable:$true] %s54
      %60 = dma.hbm_to_vmem [thread:$0]  %s53, 1024, %s55, [#allocation6], 128, 128, 8
    $region13: #{tpu_custom_call.1} parent=1 // pred_fallthru
      _
    // Predicated region
    $region14: #{tpu_custom_call.1} parent=1 // pred_check
      _
    $region15: #{tpu_custom_call.1} parent=1 // pred_check_branch
      %62 = sbr.rel (0) target = $region17
    $region16: #{tpu_custom_call.1} parent=1 // pred_region
      %64 = vsyncadd [#allocation9], 0
      %s65 = sshll.u32 %s3, 4
      %s66 = int_to_ptr.hbm [resolvable:$true] %s65
      %s67 = sshll.u32 [#allocation8], 4
      %s68 = int_to_ptr.vmem [resolvable:$true] %s67
      %73 = dma.hbm_to_vmem [thread:$0]  %s66, 2560, %s68, [#allocation9], 128, 128, 8
    $region17: #{tpu_custom_call.1} parent=1 // pred_fallthru
      _
    // Predicated region
    $region18: #{tpu_custom_call.1} parent=1 // pred_check
      _
    $region19: #{tpu_custom_call.1} parent=1 // pred_check_branch
      %75 = sbr.rel (0) target = $region21
    $region20: #{tpu_custom_call.1} parent=1 // pred_region
      _
    $region21: #{tpu_custom_call.1} parent=1 // pred_fallthru
      _
    // Predicated region
    $region22: #{tpu_custom_call.1} parent=1 // pred_check
      _
    $region23: #{tpu_custom_call.1} parent=1 // pred_check_branch
      %77 = sbr.rel (0) target = $region25
    $region24: #{tpu_custom_call.1} parent=1 // pred_region
      %79 = vsyncadd [#allocation9], 0
      %s80 = sshll.u32 %s5, 4
      %s81 = int_to_ptr.hbm [resolvable:$true] %s80
      %s82 = sshll.u32 [#allocation10], 4
      %s83 = int_to_ptr.vmem [resolvable:$true] %s82
      %88 = dma.hbm_to_vmem [thread:$0]  %s81, 4096, %s83, [#allocation9], 128, 128, 8
    $region25: #{tpu_custom_call.1} parent=1 // pred_fallthru
      _
    // Predicated region
    $region26: #{tpu_custom_call.1} parent=1 // pred_check
      _
    $region27: #{tpu_custom_call.1} parent=1 // pred_check_branch
      %90 = sbr.rel (0) target = $region29
    $region28: #{tpu_custom_call.1} parent=1 // pred_region
      _
    $region29: #{tpu_custom_call.1} parent=1 // pred_fallthru
      _
    // Predicated region
    $region30: #{tpu_custom_call.1} parent=1 // pred_check
      _
    $region31: #{tpu_custom_call.1} parent=1 // pred_check_branch
      %92 = sbr.rel (0) target = $region33
    $region32: #{tpu_custom_call.1} parent=1 // pred_region
      %94 = vsyncadd [#allocation12], 0
      %s95 = sshll.u32 %s7, 4
      %s96 = int_to_ptr.hbm [resolvable:$true] %s95
      %s97 = sshll.u32 [#allocation11], 4
      %s98 = int_to_ptr.vmem [resolvable:$true] %s97
      %103 = dma.hbm_to_vmem [thread:$0]  %s96, 2048, %s98, [#allocation12], 128, 128, 8
    $region33: #{tpu_custom_call.1} parent=1 // pred_fallthru
      _
    // Predicated region
    $region34: #{tpu_custom_call.1} parent=1 // pred_check
      _
    $region35: #{tpu_custom_call.1} parent=1 // pred_check_branch
      %105 = sbr.rel (0) target = $region37
    $region36: #{tpu_custom_call.1} parent=1 // pred_region
      _
    $region37: #{tpu_custom_call.1} parent=1 // pred_fallthru
      _
    // Predicated region
    $region38: #{tpu_custom_call.1} parent=1 // pred_check
      _
    $region39: #{tpu_custom_call.1} parent=1 // pred_check_branch
      %107 = sbr.rel (0) target = $region41
    $region40: #{tpu_custom_call.1} parent=1 // pred_region
      %109 = dma.done [#allocation3], 2048
    $region41: #{tpu_custom_call.1} parent=1 // pred_fallthru
      _
    // Predicated region
    $region42: #{tpu_custom_call.1} parent=1 // pred_check
      _
    $region43: #{tpu_custom_call.1} parent=1 // pred_check_branch
      %111 = sbr.rel (0) target = $region45
    $region44: #{tpu_custom_call.1} parent=1 // pred_region
      %113 = dma.done [#allocation6], 1024
    $region45: #{tpu_custom_call.1} parent=1 // pred_fallthru
      _
    // Predicated region
    $region46: #{tpu_custom_call.1} parent=1 // pred_check
      _
    $region47: #{tpu_custom_call.1} parent=1 // pred_check_branch
      %115 = sbr.rel (0) target = $region49
    $region48: #{tpu_custom_call.1} parent=1 // pred_region
      %117 = dma.done [#allocation6], 1024
    $region49: #{tpu_custom_call.1} parent=1 // pred_fallthru
      _
    // Predicated region
    $region50: #{tpu_custom_call.1} parent=1 // pred_check
      _
    $region51: #{tpu_custom_call.1} parent=1 // pred_check_branch
      %119 = sbr.rel (0) target = $region53
    $region52: #{tpu_custom_call.1} parent=1 // pred_region
      %121 = dma.done [#allocation9], 2560
    $region53: #{tpu_custom_call.1} parent=1 // pred_fallthru
      _
    // Predicated region
    $region54: #{tpu_custom_call.1} parent=1 // pred_check
      _
    $region55: #{tpu_custom_call.1} parent=1 // pred_check_branch
      %123 = sbr.rel (0) target = $region57
    $region56: #{tpu_custom_call.1} parent=1 // pred_region
      %125 = dma.done [#allocation9], 4096
    $region57: #{tpu_custom_call.1} parent=1 // pred_fallthru
      _
    // Predicated region
    $region58: #{tpu_custom_call.1} parent=1 // pred_check
      _
    $region59: #{tpu_custom_call.1} parent=1 // pred_check_branch
      %127 = sbr.rel (0) target = $region61
    $region60: #{tpu_custom_call.1} parent=1 // pred_region
      %129 = dma.done [#allocation12], 2048
    $region61: #{tpu_custom_call.1} parent=1 // pred_fallthru
      _
    %v130 = vld [vmem:[#allocation7] sm:$0xff]
    %v131 = vld [vmem:[#allocation7 + $0x8] sm:$0xff]
    %v132 = vld [vmem:[#allocation7 + $0x10] sm:$0xff]
    %v133 = vld [vmem:[#allocation7 + $0x18] sm:$0xff]
    %v134 = vld [vmem:[#allocation7 + $0x20] sm:$0xff]
    %v135 = vld [vmem:[#allocation7 + $0x28] sm:$0xff]
    %v136 = vld [vmem:[#allocation7 + $0x30] sm:$0xff]
    %v137 = vld [vmem:[#allocation7 + $0x38] sm:$0xff]
    %v138 = vld [vmem:[#allocation2] sm:$0xff]
    %v139 = vld [vmem:[#allocation2 + $0x8] sm:$0xff]
    %v140 = vld [vmem:[#allocation2 + $0x10] sm:$0xff]
    %v141 = vld [vmem:[#allocation2 + $0x18] sm:$0xff]
    %v142 = vld [vmem:[#allocation2 + $0x20] sm:$0xff]
    %v143 = vld [vmem:[#allocation2 + $0x28] sm:$0xff]
    %v144 = vld [vmem:[#allocation2 + $0x30] sm:$0xff]
    %v145 = vld [vmem:[#allocation2 + $0x38] sm:$0xff]
    %v146 = vld [vmem:[#allocation2 + $0x40] sm:$0xff]
    %v147 = vld [vmem:[#allocation2 + $0x48] sm:$0xff]
    %v148 = vld [vmem:[#allocation2 + $0x50] sm:$0xff]
    %v149 = vld [vmem:[#allocation2 + $0x58] sm:$0xff]
    %v150 = vld [vmem:[#allocation2 + $0x60] sm:$0xff]
    %v151 = vld [vmem:[#allocation2 + $0x68] sm:$0xff]
    %v152 = vld [vmem:[#allocation2 + $0x70] sm:$0xff]
    %v153 = vld [vmem:[#allocation2 + $0x78] sm:$0xff]
    %v154 = vld [vmem:[#allocation8] sm:$0xff]
    %v155 = vld [vmem:[#allocation8 + $0x8] sm:$0xff]
    %v156 = vld [vmem:[#allocation8 + $0x10] sm:$0xff]
    %v157 = vld [vmem:[#allocation8 + $0x18] sm:$0xff]
    %v158 = vld [vmem:[#allocation8 + $0x20] sm:$0xff]
    %v159 = vld [vmem:[#allocation8 + $0x28] sm:$0xff]
    %v160 = vld [vmem:[#allocation8 + $0x30] sm:$0xff]
    %v161 = vld [vmem:[#allocation8 + $0x38] sm:$0xff]
    %v162 = vld [vmem:[#allocation8 + $0x40] sm:$0xff]
    %v163 = vld [vmem:[#allocation8 + $0x48] sm:$0xff]
    %v164 = vld [vmem:[#allocation8 + $0x50] sm:$0xff]
    %v165 = vld [vmem:[#allocation8 + $0x58] sm:$0xff]
    %v166 = vld [vmem:[#allocation8 + $0x60] sm:$0xff]
    %v167 = vld [vmem:[#allocation8 + $0x68] sm:$0xff]
    %v168 = vld [vmem:[#allocation8 + $0x70] sm:$0xff]
    %v169 = vld [vmem:[#allocation8 + $0x78] sm:$0xff]
    %v170 = vld [vmem:[#allocation8 + $0x80] sm:$0xff]
    %v171 = vld [vmem:[#allocation8 + $0x88] sm:$0xff]
    %v172 = vld [vmem:[#allocation8 + $0x90] sm:$0xff]
    %v173 = vld [vmem:[#allocation8 + $0x98] sm:$0xff]
    %v174 = vld [vmem:[%s4] sm:$0x1]
    %v176 = vperm.slane %v174, 0
    %vm178 = vcmask 261120
    %v180 = vsel %vm178, %v139, 0
    %v183 = vsel %vm178, %v141, 0
    %v186 = vsel %vm178, %v143, 0
    %v189 = vsel %vm178, %v145, 0
    %v192 = vsel %vm178, %v147, 0
    %v195 = vsel %vm178, %v149, 0
    %v198 = vsel %vm178, %v151, 0
    %v201 = vsel %vm178, %v153, 0
    %203 = vmatpush.msra.mxu0 %v169
    %204 = vmatpush.msra.mxu0 %v168
    %205 = vmatpush.msra.mxu0 %v167
    %206 = vmatpush.msra.mxu0 %v166
    %207 = vmatpush.msra.mxu0 %v165
    %208 = vmatpush.msra.mxu0 %v164
    %209 = vmatpush.msra.mxu0 %v163
    %210 = vmatpush.msra.mxu0 %v162
    %211 = vmatpush.msra.mxu0 %v161
    %212 = vmatpush.msra.mxu0 %v160
    %213 = vmatpush.msra.mxu0 %v159
    %214 = vmatpush.msra.mxu0 %v158
    %215 = vmatpush.msra.mxu0 %v157
    %216 = vmatpush.msra.mxu0 %v156
    %217 = vmatpush.msra.mxu0 %v155
    %218 = vmatpush.msra.mxu0 %v154
    %219 = vmatmul.f32.gmra.mxu0 %v138
    %v220 = vpop.f32.mrf.mxu0
    %v221 = vadd.f32 %v176, %v220
    %222 = vmatmul.f32.gmra.mxu0 %v140
    %v223 = vpop.f32.mrf.mxu0
    %v224 = vadd.f32 %v176, %v223
    %225 = vmatmul.f32.gmra.mxu0 %v142
    %v226 = vpop.f32.mrf.mxu0
    %v227 = vadd.f32 %v176, %v226
    %228 = vmatmul.f32.gmra.mxu0 %v144
    %v229 = vpop.f32.mrf.mxu0
    %v230 = vadd.f32 %v176, %v229
    %231 = vmatmul.f32.gmra.mxu0 %v146
    %v232 = vpop.f32.mrf.mxu0
    %v233 = vadd.f32 %v176, %v232
    %234 = vmatmul.f32.gmra.mxu0 %v148
    %v235 = vpop.f32.mrf.mxu0
    %v236 = vadd.f32 %v176, %v235
    %237 = vmatmul.f32.gmra.mxu0 %v150
    %v238 = vpop.f32.mrf.mxu0
    %v239 = vadd.f32 %v176, %v238
    %240 = vmatmul.f32.gmra.mxu0 %v152
    %v241 = vpop.f32.mrf.mxu0
    %v242 = vadd.f32 %v176, %v241
    %243 = vdwg.mxu0
    %244 = vmatpush.msra.mxu0 0.0
    %245 = vmatpush.msra.mxu0 0.0
    %246 = vmatpush.msra.mxu0 0.0
    %247 = vmatpush.msra.mxu0 0.0
    %248 = vmatpush.msra.mxu0 0.0
    %249 = vmatpush.msra.mxu0 0.0
    %250 = vmatpush.msra.mxu0 0.0
    %251 = vmatpush.msra.mxu0 0.0
    %252 = vmatpush.msra.mxu0 0.0
    %253 = vmatpush.msra.mxu0 0.0
    %254 = vmatpush.msra.mxu0 0.0
    %255 = vmatpush.msra.mxu0 0.0
    %256 = vmatpush.msra.mxu0 %v173
    %257 = vmatpush.msra.mxu0 %v172
    %258 = vmatpush.msra.mxu0 %v171
    %259 = vmatpush.msra.mxu0 %v170
    %260 = vmatmul.f32.gmra.mxu0 %v180
    %v261 = vpop.f32.mrf.mxu0
    %v262 = vadd.f32 %v221, %v261
    %263 = vmatmul.f32.gmra.mxu0 %v183
    %v264 = vpop.f32.mrf.mxu0
    %v265 = vadd.f32 %v224, %v264
    %266 = vmatmul.f32.gmra.mxu0 %v186
    %v267 = vpop.f32.mrf.mxu0
    %v268 = vadd.f32 %v227, %v267
    %269 = vmatmul.f32.gmra.mxu0 %v189
    %v270 = vpop.f32.mrf.mxu0
    %v271 = vadd.f32 %v230, %v270
    %272 = vmatmul.f32.gmra.mxu0 %v192
    %v273 = vpop.f32.mrf.mxu0
    %v274 = vadd.f32 %v233, %v273
    %275 = vmatmul.f32.gmra.mxu0 %v195
    %v276 = vpop.f32.mrf.mxu0
    %v277 = vadd.f32 %v236, %v276
    %278 = vmatmul.f32.gmra.mxu0 %v198
    %v279 = vpop.f32.mrf.mxu0
    %v280 = vadd.f32 %v239, %v279
    %281 = vmatmul.f32.gmra.mxu0 %v201
    %v282 = vpop.f32.mrf.mxu0
    %v283 = vadd.f32 %v242, %v282
    %284 = vdwg.mxu0
    %v285 = vld [vmem:[#allocation5] sm:$0xff]
    %v286 = vld [vmem:[#allocation5 + $0x8] sm:$0xff]
    %v287 = vld [vmem:[#allocation5 + $0x10] sm:$0xff]
    %v288 = vld [vmem:[#allocation5 + $0x18] sm:$0xff]
    %v289 = vld [vmem:[#allocation5 + $0x20] sm:$0xff]
    %v290 = vld [vmem:[#allocation5 + $0x28] sm:$0xff]
    %v291 = vld [vmem:[#allocation5 + $0x30] sm:$0xff]
    %v292 = vld [vmem:[#allocation5 + $0x38] sm:$0xff]
    %v293 = vld [vmem:[#allocation10] sm:$0xff]
    %v294 = vld [vmem:[#allocation10 + $0x8] sm:$0xff]
    %v295 = vld [vmem:[#allocation10 + $0x10] sm:$0xff]
    %v296 = vld [vmem:[#allocation10 + $0x18] sm:$0xff]
    %v297 = vld [vmem:[#allocation10 + $0x20] sm:$0xff]
    %v298 = vld [vmem:[#allocation10 + $0x28] sm:$0xff]
    %v299 = vld [vmem:[#allocation10 + $0x30] sm:$0xff]
    %v300 = vld [vmem:[#allocation10 + $0x38] sm:$0xff]
    %v301 = vld [vmem:[#allocation10 + $0x40] sm:$0xff]
    %v302 = vld [vmem:[#allocation10 + $0x48] sm:$0xff]
    %v303 = vld [vmem:[#allocation10 + $0x50] sm:$0xff]
    %v304 = vld [vmem:[#allocation10 + $0x58] sm:$0xff]
    %v305 = vld [vmem:[#allocation10 + $0x60] sm:$0xff]
    %v306 = vld [vmem:[#allocation10 + $0x68] sm:$0xff]
    %v307 = vld [vmem:[#allocation10 + $0x70] sm:$0xff]
    %v308 = vld [vmem:[#allocation10 + $0x78] sm:$0xff]
    %v309 = vld [vmem:[%s6] sm:$0x1]
    %v311 = vperm.slane %v309, 0
    %313 = vmatpush.msra.mxu0 %v308
    %314 = vmatpush.msra.mxu0 %v307
    %315 = vmatpush.msra.mxu0 %v306
    %316 = vmatpush.msra.mxu0 %v305
    %317 = vmatpush.msra.mxu0 %v304
    %318 = vmatpush.msra.mxu0 %v303
    %319 = vmatpush.msra.mxu0 %v302
    %320 = vmatpush.msra.mxu0 %v301
    %321 = vmatpush.msra.mxu0 %v300
    %322 = vmatpush.msra.mxu0 %v299
    %323 = vmatpush.msra.mxu0 %v298
    %324 = vmatpush.msra.mxu0 %v297
    %325 = vmatpush.msra.mxu0 %v296
    %326 = vmatpush.msra.mxu0 %v295
    %327 = vmatpush.msra.mxu0 %v294
    %328 = vmatpush.msra.mxu0 %v293
    %329 = vmatmul.f32.gmra.mxu0 %v262
    %v330 = vpop.f32.mrf.mxu0
    %v331 = vadd.f32 %v311, %v330
    %332 = vmatmul.f32.gmra.mxu0 %v265
    %v333 = vpop.f32.mrf.mxu0
    %v334 = vadd.f32 %v311, %v333
    %335 = vmatmul.f32.gmra.mxu0 %v268
    %v336 = vpop.f32.mrf.mxu0
    %v337 = vadd.f32 %v311, %v336
    %338 = vmatmul.f32.gmra.mxu0 %v271
    %v339 = vpop.f32.mrf.mxu0
    %v340 = vadd.f32 %v311, %v339
    %341 = vmatmul.f32.gmra.mxu0 %v274
    %v342 = vpop.f32.mrf.mxu0
    %v343 = vadd.f32 %v311, %v342
    %344 = vmatmul.f32.gmra.mxu0 %v277
    %v345 = vpop.f32.mrf.mxu0
    %v346 = vadd.f32 %v311, %v345
    %347 = vmatmul.f32.gmra.mxu0 %v280
    %v348 = vpop.f32.mrf.mxu0
    %v349 = vadd.f32 %v311, %v348
    %350 = vmatmul.f32.gmra.mxu0 %v283
    %v351 = vpop.f32.mrf.mxu0
    %v352 = vadd.f32 %v311, %v351
    %353 = vdwg.mxu0
    %v354 = vmax.f32 %v331, 0.0
    %v355 = vmax.f32 %v334, 0.0
    %v356 = vmax.f32 %v337, 0.0
    %v357 = vmax.f32 %v340, 0.0
    %v358 = vmax.f32 %v343, 0.0
    %v359 = vmax.f32 %v346, 0.0
    %v360 = vmax.f32 %v349, 0.0
    %v361 = vmax.f32 %v352, 0.0
    %vm362 = vcmask 523264
    %v364 = vsel %vm362, %v130, 0
    %v367 = vsel %vm362, %v131, 0
    %v370 = vsel %vm362, %v132, 0
    %v373 = vsel %vm362, %v133, 0
    %v376 = vsel %vm362, %v134, 0
    %v379 = vsel %vm362, %v135, 0
    %v382 = vsel %vm362, %v136, 0
    %v385 = vsel %vm362, %v137, 0
    %387 = vmatpush.msra.mxu0 0.0
    %388 = vmatpush.msra.mxu0 0.0
    %389 = vmatpush.msra.mxu0 0.0
    %390 = vmatpush.msra.mxu0 0.0
    %391 = vmatpush.msra.mxu0 0.0
    %392 = vmatpush.msra.mxu0 0.0
    %393 = vmatpush.msra.mxu0 0.0
    %394 = vmatpush.msra.mxu0 0.0
    %395 = vmatpush.msra.mxu0 %v361
    %396 = vmatpush.msra.mxu0 %v360
    %397 = vmatpush.msra.mxu0 %v359
    %398 = vmatpush.msra.mxu0 %v358
    %399 = vmatpush.msra.mxu0 %v357
    %400 = vmatpush.msra.mxu0 %v356
    %401 = vmatpush.msra.mxu0 %v355
    %402 = vmatpush.msra.mxu0 %v354
    %403 = vmatmul.f32.gmra.mxu0 %v364
    %v404 = vpop.f32.mrf.mxu0
    %v405 = vadd.f32 0.0, %v404
    %406 = vmatmul.f32.gmra.mxu0 %v367
    %v407 = vpop.f32.mrf.mxu0
    %v408 = vadd.f32 0.0, %v407
    %409 = vmatmul.f32.gmra.mxu0 %v370
    %v410 = vpop.f32.mrf.mxu0
    %v411 = vadd.f32 0.0, %v410
    %412 = vmatmul.f32.gmra.mxu0 %v373
    %v413 = vpop.f32.mrf.mxu0
    %v414 = vadd.f32 0.0, %v413
    %415 = vmatmul.f32.gmra.mxu0 %v376
    %v416 = vpop.f32.mrf.mxu0
    %v417 = vadd.f32 0.0, %v416
    %418 = vmatmul.f32.gmra.mxu0 %v379
    %v419 = vpop.f32.mrf.mxu0
    %v420 = vadd.f32 0.0, %v419
    %421 = vmatmul.f32.gmra.mxu0 %v382
    %v422 = vpop.f32.mrf.mxu0
    %v423 = vadd.f32 0.0, %v422
    %424 = vmatmul.f32.gmra.mxu0 %v385
    %v425 = vpop.f32.mrf.mxu0
    %v426 = vadd.f32 0.0, %v425
    %427 = vdwg.mxu0
    %v428 = vadd.f32 %v262, %v405
    %v429 = vadd.f32 %v265, %v408
    %v430 = vadd.f32 %v268, %v411
    %v431 = vadd.f32 %v271, %v414
    %v432 = vadd.f32 %v274, %v417
    %v433 = vadd.f32 %v277, %v420
    %v434 = vadd.f32 %v280, %v423
    %v435 = vadd.f32 %v283, %v426
    %v436 = vadd.f32 %v285, %v428
    %v437 = vadd.f32 %v286, %v429
    %v438 = vadd.f32 %v287, %v430
    %v439 = vadd.f32 %v288, %v431
    %v440 = vadd.f32 %v289, %v432
    %v441 = vadd.f32 %v290, %v433
    %v442 = vadd.f32 %v291, %v434
    %v443 = vadd.f32 %v292, %v435
    %s444 = scalar_lea.vmem [#allocation10], 128
    %v445 = vld [vmem:[%s444] sm:$0xff]
    %v446 = vld [vmem:[%s444 + $0x8] sm:$0xff]
    %v447 = vld [vmem:[%s444 + $0x10] sm:$0xff]
    %v448 = vld [vmem:[%s444 + $0x18] sm:$0xff]
    %v449 = vld [vmem:[%s444 + $0x20] sm:$0xff]
    %v450 = vld [vmem:[%s444 + $0x28] sm:$0xff]
    %v451 = vld [vmem:[%s444 + $0x30] sm:$0xff]
    %v452 = vld [vmem:[%s444 + $0x38] sm:$0xff]
    %v453 = vld [vmem:[%s444 + $0x40] sm:$0xff]
    %v454 = vld [vmem:[%s444 + $0x48] sm:$0xff]
    %v455 = vld [vmem:[%s444 + $0x50] sm:$0xff]
    %v456 = vld [vmem:[%s444 + $0x58] sm:$0xff]
    %v457 = vld [vmem:[%s444 + $0x60] sm:$0xff]
    %v458 = vld [vmem:[%s444 + $0x68] sm:$0xff]
    %v459 = vld [vmem:[%s444 + $0x70] sm:$0xff]
    %v460 = vld [vmem:[%s444 + $0x78] sm:$0xff]
    %s461 = scalar_lea.vmem %s6, 1
    %v462 = vld [vmem:[%s461] sm:$0x1]
    %v464 = vperm.slane %v462, 0
    %466 = vmatpush.msra.mxu0 %v460
    %467 = vmatpush.msra.mxu0 %v459
    %468 = vmatpush.msra.mxu0 %v458
    %469 = vmatpush.msra.mxu0 %v457
    %470 = vmatpush.msra.mxu0 %v456
    %471 = vmatpush.msra.mxu0 %v455
    %472 = vmatpush.msra.mxu0 %v454
    %473 = vmatpush.msra.mxu0 %v453
    %474 = vmatpush.msra.mxu0 %v452
    %475 = vmatpush.msra.mxu0 %v451
    %476 = vmatpush.msra.mxu0 %v450
    %477 = vmatpush.msra.mxu0 %v449
    %478 = vmatpush.msra.mxu0 %v448
    %479 = vmatpush.msra.mxu0 %v447
    %480 = vmatpush.msra.mxu0 %v446
    %481 = vmatpush.msra.mxu0 %v445
    %482 = vmatmul.f32.gmra.mxu0 %v428
    %v483 = vpop.f32.mrf.mxu0
    %v484 = vadd.f32 %v464, %v483
    %485 = vmatmul.f32.gmra.mxu0 %v429
    %v486 = vpop.f32.mrf.mxu0
    %v487 = vadd.f32 %v464, %v486
    %488 = vmatmul.f32.gmra.mxu0 %v430
    %v489 = vpop.f32.mrf.mxu0
    %v490 = vadd.f32 %v464, %v489
    %491 = vmatmul.f32.gmra.mxu0 %v431
    %v492 = vpop.f32.mrf.mxu0
    %v493 = vadd.f32 %v464, %v492
    %494 = vmatmul.f32.gmra.mxu0 %v432
    %v495 = vpop.f32.mrf.mxu0
    %v496 = vadd.f32 %v464, %v495
    %497 = vmatmul.f32.gmra.mxu0 %v433
    %v498 = vpop.f32.mrf.mxu0
    %v499 = vadd.f32 %v464, %v498
    %500 = vmatmul.f32.gmra.mxu0 %v434
    %v501 = vpop.f32.mrf.mxu0
    %v502 = vadd.f32 %v464, %v501
    %503 = vmatmul.f32.gmra.mxu0 %v435
    %v504 = vpop.f32.mrf.mxu0
    %v505 = vadd.f32 %v464, %v504
    %506 = vdwg.mxu0
    %v507 = vmax.f32 %v484, 0.0
    %v508 = vmax.f32 %v487, 0.0
    %v509 = vmax.f32 %v490, 0.0
    %v510 = vmax.f32 %v493, 0.0
    %v511 = vmax.f32 %v496, 0.0
    %v512 = vmax.f32 %v499, 0.0
    %v513 = vmax.f32 %v502, 0.0
    %v514 = vmax.f32 %v505, 0.0
    %515 = vmatpush.msra.mxu0 0.0
    %516 = vmatpush.msra.mxu0 0.0
    %517 = vmatpush.msra.mxu0 0.0
    %518 = vmatpush.msra.mxu0 0.0
    %519 = vmatpush.msra.mxu0 0.0
    %520 = vmatpush.msra.mxu0 0.0
    %521 = vmatpush.msra.mxu0 0.0
    %522 = vmatpush.msra.mxu0 0.0
    %523 = vmatpush.msra.mxu0 %v514
    %524 = vmatpush.msra.mxu0 %v513
    %525 = vmatpush.msra.mxu0 %v512
    %526 = vmatpush.msra.mxu0 %v511
    %527 = vmatpush.msra.mxu0 %v510
    %528 = vmatpush.msra.mxu0 %v509
    %529 = vmatpush.msra.mxu0 %v508
    %530 = vmatpush.msra.mxu0 %v507
    %531 = vmatmul.f32.gmra.mxu0 %v364
    %v532 = vpop.f32.mrf.mxu0
    %v533 = vadd.f32 0.0, %v532
    %534 = vmatmul.f32.gmra.mxu0 %v367
    %v535 = vpop.f32.mrf.mxu0
    %v536 = vadd.f32 0.0, %v535
    %537 = vmatmul.f32.gmra.mxu0 %v370
    %v538 = vpop.f32.mrf.mxu0
    %v539 = vadd.f32 0.0, %v538
    %540 = vmatmul.f32.gmra.mxu0 %v373
    %v541 = vpop.f32.mrf.mxu0
    %v542 = vadd.f32 0.0, %v541
    %543 = vmatmul.f32.gmra.mxu0 %v376
    %v544 = vpop.f32.mrf.mxu0
    %v545 = vadd.f32 0.0, %v544
    %546 = vmatmul.f32.gmra.mxu0 %v379
    %v547 = vpop.f32.mrf.mxu0
    %v548 = vadd.f32 0.0, %v547
    %549 = vmatmul.f32.gmra.mxu0 %v382
    %v550 = vpop.f32.mrf.mxu0
    %v551 = vadd.f32 0.0, %v550
    %552 = vmatmul.f32.gmra.mxu0 %v385
    %v553 = vpop.f32.mrf.mxu0
    %v554 = vadd.f32 0.0, %v553
    %555 = vdwg.mxu0
    %v556 = vadd.f32 %v428, %v533
    %v557 = vadd.f32 %v429, %v536
    %v558 = vadd.f32 %v430, %v539
    %v559 = vadd.f32 %v431, %v542
    %v560 = vadd.f32 %v432, %v545
    %v561 = vadd.f32 %v433, %v548
    %v562 = vadd.f32 %v434, %v551
    %v563 = vadd.f32 %v435, %v554
    %v564 = vld [vmem:[#allocation11] sm:$0xff]
    %v565 = vld [vmem:[#allocation11 + $0x8] sm:$0xff]
    %v566 = vld [vmem:[#allocation11 + $0x10] sm:$0xff]
    %v567 = vld [vmem:[#allocation11 + $0x18] sm:$0xff]
    %v568 = vld [vmem:[#allocation11 + $0x20] sm:$0xff]
    %v569 = vld [vmem:[#allocation11 + $0x28] sm:$0xff]
    %v570 = vld [vmem:[#allocation11 + $0x30] sm:$0xff]
    %v571 = vld [vmem:[#allocation11 + $0x38] sm:$0xff]
    %v572 = vld [vmem:[#allocation11 + $0x40] sm:$0xff]
    %v573 = vld [vmem:[#allocation11 + $0x48] sm:$0xff]
    %v574 = vld [vmem:[#allocation11 + $0x50] sm:$0xff]
    %v575 = vld [vmem:[#allocation11 + $0x58] sm:$0xff]
    %v576 = vld [vmem:[#allocation11 + $0x60] sm:$0xff]
    %v577 = vld [vmem:[#allocation11 + $0x68] sm:$0xff]
    %v578 = vld [vmem:[#allocation11 + $0x70] sm:$0xff]
    %v579 = vld [vmem:[#allocation11 + $0x78] sm:$0xff]
    %v580 = vld [vmem:[%s8] sm:$0x1]
    %v582 = vperm.slane %v580, 0
    %584 = vmatpush.msra.mxu0 %v579
    %585 = vmatpush.msra.mxu0 %v578
    %586 = vmatpush.msra.mxu0 %v577
    %587 = vmatpush.msra.mxu0 %v576
    %588 = vmatpush.msra.mxu0 %v575
    %589 = vmatpush.msra.mxu0 %v574
    %590 = vmatpush.msra.mxu0 %v573
    %591 = vmatpush.msra.mxu0 %v572
    %592 = vmatpush.msra.mxu0 %v571
    %593 = vmatpush.msra.mxu0 %v570
    %594 = vmatpush.msra.mxu0 %v569
    %595 = vmatpush.msra.mxu0 %v568
    %596 = vmatpush.msra.mxu0 %v567
    %597 = vmatpush.msra.mxu0 %v566
    %598 = vmatpush.msra.mxu0 %v565
    %599 = vmatpush.msra.mxu0 %v564
    %600 = vmatmul.f32.gmra.mxu0 %v556
    %v601 = vpop.f32.mrf.mxu0
    %v602 = vadd.f32 %v582, %v601
    %603 = vmatmul.f32.gmra.mxu0 %v557
    %v604 = vpop.f32.mrf.mxu0
    %v605 = vadd.f32 %v582, %v604
    %606 = vmatmul.f32.gmra.mxu0 %v558
    %v607 = vpop.f32.mrf.mxu0
    %v608 = vadd.f32 %v582, %v607
    %609 = vmatmul.f32.gmra.mxu0 %v559
    %v610 = vpop.f32.mrf.mxu0
    %v611 = vadd.f32 %v582, %v610
    %612 = vmatmul.f32.gmra.mxu0 %v560
    %v613 = vpop.f32.mrf.mxu0
    %v614 = vadd.f32 %v582, %v613
    %615 = vmatmul.f32.gmra.mxu0 %v561
    %v616 = vpop.f32.mrf.mxu0
    %v617 = vadd.f32 %v582, %v616
    %618 = vmatmul.f32.gmra.mxu0 %v562
    %v619 = vpop.f32.mrf.mxu0
    %v620 = vadd.f32 %v582, %v619
    %621 = vmatmul.f32.gmra.mxu0 %v563
    %v622 = vpop.f32.mrf.mxu0
    %v623 = vadd.f32 %v582, %v622
    %624 = vdwg.mxu0
    %v625 = vadd.f32 %v436, %v602
    %v626 = vadd.f32 %v437, %v605
    %v627 = vadd.f32 %v438, %v608
    %v628 = vadd.f32 %v439, %v611
    %v629 = vadd.f32 %v440, %v614
    %v630 = vadd.f32 %v441, %v617
    %v631 = vadd.f32 %v442, %v620
    %v632 = vadd.f32 %v443, %v623
    %633 = vst [vmem:[#allocation13] sm:$0xff] %v602
    %634 = vst [vmem:[#allocation13 + $0x8] sm:$0xff] %v605
    %635 = vst [vmem:[#allocation13 + $0x10] sm:$0xff] %v608
    %636 = vst [vmem:[#allocation13 + $0x18] sm:$0xff] %v611
    %637 = vst [vmem:[#allocation13 + $0x20] sm:$0xff] %v614
    %638 = vst [vmem:[#allocation13 + $0x28] sm:$0xff] %v617
    %639 = vst [vmem:[#allocation13 + $0x30] sm:$0xff] %v620
    %640 = vst [vmem:[#allocation13 + $0x38] sm:$0xff] %v623
    %641 = vst [vmem:[#allocation14] sm:$0xff] %v625
    %642 = vst [vmem:[#allocation14 + $0x8] sm:$0xff] %v626
    %643 = vst [vmem:[#allocation14 + $0x10] sm:$0xff] %v627
    %644 = vst [vmem:[#allocation14 + $0x18] sm:$0xff] %v628
    %645 = vst [vmem:[#allocation14 + $0x20] sm:$0xff] %v629
    %646 = vst [vmem:[#allocation14 + $0x28] sm:$0xff] %v630
    %647 = vst [vmem:[#allocation14 + $0x30] sm:$0xff] %v631
    %648 = vst [vmem:[#allocation14 + $0x38] sm:$0xff] %v632
    // Predicated region
    $region62: #{tpu_custom_call.1} parent=1 // pred_check
      _
    $region63: #{tpu_custom_call.1} parent=1 // pred_check_branch
      %650 = sbr.rel (0) target = $region65
    $region64: #{tpu_custom_call.1} parent=1 // pred_region
      %652 = vsyncadd [#allocation4], 0
      %s653 = sshll.u32 [#allocation13], 4
      %s654 = int_to_ptr.vmem [resolvable:$true] %s653
      %s655 = sshll.u32 %s9, 4
      %s656 = int_to_ptr.hbm [resolvable:$true] %s655
      %661 = dma.vmem_to_hbm [thread:$0]  %s654, 1024, %s656, [#allocation4], 128, 128, 8
    $region65: #{tpu_custom_call.1} parent=1 // pred_fallthru
      _
    // Predicated region
    $region66: #{tpu_custom_call.1} parent=1 // pred_check
      _
    $region67: #{tpu_custom_call.1} parent=1 // pred_check_branch
      %663 = sbr.rel (0) target = $region69
    $region68: #{tpu_custom_call.1} parent=1 // pred_region
      %665 = vsyncadd [#allocation15], 0
      %s666 = sshll.u32 [#allocation14], 4
      %s667 = int_to_ptr.vmem [resolvable:$true] %s666
      %s668 = sshll.u32 %s10, 4
      %s669 = int_to_ptr.hbm [resolvable:$true] %s668
      %674 = dma.vmem_to_hbm [thread:$0]  %s667, 1024, %s669, [#allocation15], 128, 128, 8
    $region69: #{tpu_custom_call.1} parent=1 // pred_fallthru
      _
    // Predicated region
    $region70: #{tpu_custom_call.1} parent=1 // pred_check
      _
    $region71: #{tpu_custom_call.1} parent=1 // pred_check_branch
      %676 = sbr.rel (0) target = $region73
    $region72: #{tpu_custom_call.1} parent=1 // pred_region
      %678 = dma.done [#allocation4], 1024
    $region73: #{tpu_custom_call.1} parent=1 // pred_fallthru
      _
    // Predicated region
    $region74: #{tpu_custom_call.1} parent=1 // pred_check
      _
    $region75: #{tpu_custom_call.1} parent=1 // pred_check_branch
      %680 = sbr.rel (0) target = $region77
    $region76: #{tpu_custom_call.1} parent=1 // pred_region
      %682 = dma.done [#allocation15], 1024
    $region77: #{tpu_custom_call.1} parent=1 // pred_fallthru
      _
    %683 = vsyncpa [#allocation3], 1
    %684 = vsyncpa [#allocation6], 1
    %685 = vsyncpa [#allocation9], 1
    %686 = vsyncpa [#allocation12], 1
    %687 = vsyncpa [#allocation4], 1
    %688 = vsyncpa [#allocation15], 1

</llo_original>
